<compile_context>
chip_gen: v6e
topology: v6e:2x2x1
jax: 0.10.0
libtpu: 0.0.40
codegen_flags: <defaults>
</compile_context>

<pallas_src>
import functools

import jax
import jax.numpy as jnp
import numpy as np
from jax import lax
from jax.experimental import pallas as pl
from jax.experimental.pallas import tpu as pltpu


# ----------------------------- Pallas kernel ------------------------------- #
def _second_kernel(x_ref, poi_ref, *refs, batch_size, num_convs):
    """x_ref: (2B, P) stacked [even-block; odd-block]; poi_ref: (2B, 1);
    refs = (w_0, ..., w_{L-2}, w_last_row, out_ref); out_ref: (1, 2B)."""
    B = batch_size
    w_refs = refs[: num_convs - 1]          # matmul-form weights (K_in, C_out)
    wlast_ref = refs[num_convs - 1]         # last conv weight as a (1, C) row
    out_ref = refs[num_convs]

    # Fused glue: diff = pos - poi (the batch gather degenerates to a broadcast).
    h = x_ref[...] - poi_ref[...]           # (2B, P)

    # All convs except the last: one MXU matmul per layer on the stacked operand,
    # followed by the equivariant sigmoid gate (shared between even/odd halves).
    for i in range(num_convs - 1):
        h = jnp.dot(h, w_refs[i][...], preferred_element_type=jnp.float32)  # (2B, C)
        hsq = h * h
        r = jax.nn.sigmoid(hsq[:B, :] + hsq[B:, :] + 1e-5)                  # (B, C)
        h = h * jnp.concatenate([r, r], axis=0)                             # (2B, C)

    # Last conv (C_out = 1) on the VPU/XLU: elementwise multiply + lane reduce.
    s = jnp.sum(h * wlast_ref[...], axis=-1, keepdims=True)                 # (2B, 1)

    # L2 normalize over the (even, odd) pair:
    #   rsqrt(max(ss, 1e-24)) == 1 / max(||.||_2, 1e-12).
    ssq = s * s
    inv = lax.rsqrt(jnp.maximum(ssq[:B, :] + ssq[B:, :], 1e-24))            # (B, 1)
    out_col = s * jnp.concatenate([inv, inv], axis=0)                       # (2B, 1)

    # Lane-dense store: turn the (2B, 1) column into a (1, 2B) row using an
    # iota-mask "transpose" (pure VPU multiply + sublane reduce).
    n = 2 * B
    eye = (lax.broadcasted_iota(jnp.int32, (n, n), 0)
           == lax.broadcasted_iota(jnp.int32, (n, n), 1)).astype(jnp.float32)
    out_ref[...] = jnp.sum(out_col * eye, axis=0, keepdims=True)            # (1, 2B)


# ------------------------------ forward wrapper ----------------------------- #
def second_forward(pos, poi_pos, batch_idx, weights, *, batch_size, nodes_per_graph):
    """Forward pass of `Second`; all arithmetic happens inside one Pallas kernel."""
    del batch_idx  # contiguous equal-sized graphs assumed (module's reshape needs it)
    B, P = batch_size, nodes_per_graph
    num_convs = len(weights)

    # Layout-only glue (no arithmetic): even/odd channel split on the leading axis.
    pos3 = pos.astype(jnp.float32).reshape(B, P, 2)
    x_stacked = jnp.transpose(pos3, (2, 0, 1)).reshape(2 * B, P)            # (2B, P)
    poi_col = jnp.transpose(poi_pos.astype(jnp.float32), (1, 0)).reshape(2 * B, 1)
    w_mats = [w.astype(jnp.float32) for w in weights[:-1]]
    w_last_row = weights[-1].astype(jnp.float32).reshape(1, -1)             # (1, C)

    operands = [x_stacked, poi_col, *w_mats, w_last_row]
    kernel = functools.partial(_second_kernel, batch_size=B, num_convs=num_convs)

    out_row = pl.pallas_call(
        kernel,
        out_shape=jax.ShapeDtypeStruct((1, 2 * B), jnp.float32),
        grid=(),
        in_specs=[pl.BlockSpec(op.shape, lambda: (0, 0)) for op in operands],
        out_specs=pl.BlockSpec((1, 2 * B), lambda: (0, 0)),
    )(*operands)

    # (1, 2B) row [even-block | odd-block]  ->  (B, 2) with columns [even, odd].
    return jnp.transpose(out_row.reshape(2, B), (1, 0))


# --------------------------- reference (pure JAX) --------------------------- #
def second_reference(pos, poi_pos, batch_idx, weights, *, batch_size, nodes_per_graph):
    diff_pos = pos - poi_pos[batch_idx]
    diff_pos = diff_pos.reshape(batch_size, nodes_per_graph, 2)
    he = diff_pos[..., 0].astype(jnp.float32)
    ho = diff_pos[..., 1].astype(jnp.float32)
    for i, w in enumerate(weights):
        he = he @ w
        ho = ho @ w
        if i < len(weights) - 1:
            r = jax.nn.sigmoid(he * he + ho * ho + 1e-5)
            he = he * r
            ho = ho * r
    out = jnp.concatenate([he, ho], axis=1)
    n = jnp.maximum(jnp.linalg.norm(out, axis=1, keepdims=True), 1e-12)
    return out / n


# ------------------------------ parameter init ------------------------------ #
def init_weights(key, hidden_dim, hidden_layers):
    """Conv2d weights, already reshaped/transposed to matmul form (K_in, C_out)."""
    dims = [2] + [hidden_dim] * hidden_layers + [2]
    weights = []
    for idx, (c_in, c_out) in enumerate(zip(dims, dims[1:])):
        step = 10 if idx == 0 else 1
        cin2, cout2 = c_in // 2, c_out // 2
        key, sub = jax.random.split(key)
        # PyTorch conv weight shape: (cout2, cin2, step, 1)
        fan_in = cin2 * step
        w = jax.random.normal(sub, (cout2, cin2, step, 1), jnp.float32) / np.sqrt(fan_in)
        # matmul form: input columns are (cin2 * step) flattened -> (K_in, C_out)
        w_mat = jnp.transpose(w.reshape(cout2, cin2 * step), (1, 0))
        weights.append(w_mat)
    return weights


# ----------------------------------- main ----------------------------------- #
if __name__ == "__main__":
    BATCH_SIZE = 4          # number of graphs
    NODES_PER_GRAPH = 10    # forced by the (10,1)-stride first conv + final view
    HIDDEN_DIM = 32
    HIDDEN_LAYERS = 2

    key = jax.random.PRNGKey(0)
    k_pos, k_poi, k_w = jax.random.split(key, 3)

    N = BATCH_SIZE * NODES_PER_GRAPH
    pos = jax.random.normal(k_pos, (N, 2), jnp.float32)
    poi_pos = jax.random.normal(k_poi, (BATCH_SIZE, 2), jnp.float32)
    batch_idx = jnp.repeat(jnp.arange(BATCH_SIZE, dtype=jnp.int32), NODES_PER_GRAPH)

    weights = init_weights(k_w, HIDDEN_DIM, HIDDEN_LAYERS)

    fwd = jax.jit(functools.partial(
        second_forward, batch_size=BATCH_SIZE, nodes_per_graph=NODES_PER_GRAPH))
    out = fwd(pos, poi_pos, batch_idx, weights)
    out = jax.block_until_ready(out)

    ref = second_reference(
        pos, poi_pos, batch_idx, weights,
        batch_size=BATCH_SIZE, nodes_per_graph=NODES_PER_GRAPH,
    )
    np.testing.assert_allclose(np.asarray(out), np.asarray(ref), rtol=1e-5, atol=1e-5)

    print("KERNEL_OK")
</pallas_src>

<mosaic_0001>
module attributes {stable_mosaic.version = 11 : i64} {
  func.func @_second_kernel(%arg0: memref<8x10xf32, #tpu.memory_space<vmem>>, %arg1: memref<8x1xf32, #tpu.memory_space<vmem>>, %arg2: memref<10x16xf32, #tpu.memory_space<vmem>>, %arg3: memref<16x16xf32, #tpu.memory_space<vmem>>, %arg4: memref<1x16xf32, #tpu.memory_space<vmem>>, %arg5: memref<1x8xf32, #tpu.memory_space<vmem>>) attributes {dimension_semantics = [], scalar_prefetch = 0 : i64, scratch_operands = 0 : i64, tpu.core_type = #tpu.core_type<tc>} {
    %c0 = arith.constant 0 : index
    %c0_0 = arith.constant 0 : index
    %0 = vector.load %arg0[%c0, %c0_0] : memref<8x10xf32, #tpu.memory_space<vmem>>, vector<8x10xf32>
    %c0_1 = arith.constant 0 : index
    %c0_2 = arith.constant 0 : index
    %1 = vector.load %arg1[%c0_1, %c0_2] : memref<8x1xf32, #tpu.memory_space<vmem>>, vector<8x1xf32>
    %2 = vector.broadcast %1 : vector<8x1xf32> to vector<8x10xf32>
    %3 = arith.subf %0, %2 : vector<8x10xf32>
    %c0_3 = arith.constant 0 : index
    %c0_4 = arith.constant 0 : index
    %4 = vector.load %arg2[%c0_3, %c0_4] : memref<10x16xf32, #tpu.memory_space<vmem>>, vector<10x16xf32>
    %cst = arith.constant dense<0.000000e+00> : vector<8x16xf32>
    %5 = tpu.matmul %3, %4, %cst {dimension_numbers = #tpu.dot_dimension_numbers<[1], [0], [0], [1], [0, 0, 1, 1], [], []>} : vector<8x10xf32>, vector<10x16xf32>, vector<8x16xf32> -> vector<8x16xf32>
    %6 = arith.mulf %5, %5 : vector<8x16xf32>
    %7 = vector.extract_strided_slice %6 {offsets = [0, 0], sizes = [4, 16], strides = [1, 1]} : vector<8x16xf32> to vector<4x16xf32>
    %8 = vector.extract_strided_slice %6 {offsets = [4, 0], sizes = [4, 16], strides = [1, 1]} : vector<8x16xf32> to vector<4x16xf32>
    %9 = arith.addf %7, %8 : vector<4x16xf32>
    %cst_5 = arith.constant 9.99999974E-6 : f32
    %10 = vector.broadcast %cst_5 : f32 to vector<4x16xf32>
    %11 = arith.addf %9, %10 : vector<4x16xf32>
    %12 = arith.negf %11 : vector<4x16xf32>
    %13 = math.exp %12 : vector<4x16xf32>
    %cst_6 = arith.constant 1.000000e+00 : f32
    %14 = vector.broadcast %cst_6 : f32 to vector<4x16xf32>
    %15 = arith.addf %14, %13 : vector<4x16xf32>
    %16 = arith.divf %14, %15 : vector<4x16xf32>
    %17 = tpu.concatenate %16, %16 in 0 : vector<4x16xf32>, vector<4x16xf32> -> vector<8x16xf32>
    %18 = arith.mulf %5, %17 : vector<8x16xf32>
    %c0_7 = arith.constant 0 : index
    %c0_8 = arith.constant 0 : index
    %19 = vector.load %arg3[%c0_7, %c0_8] : memref<16x16xf32, #tpu.memory_space<vmem>>, vector<16x16xf32>
    %cst_9 = arith.constant dense<0.000000e+00> : vector<8x16xf32>
    %20 = tpu.matmul %18, %19, %cst_9 {dimension_numbers = #tpu.dot_dimension_numbers<[1], [0], [0], [1], [0, 0, 1, 1], [], []>} : vector<8x16xf32>, vector<16x16xf32>, vector<8x16xf32> -> vector<8x16xf32>
    %21 = arith.mulf %20, %20 : vector<8x16xf32>
    %22 = vector.extract_strided_slice %21 {offsets = [0, 0], sizes = [4, 16], strides = [1, 1]} : vector<8x16xf32> to vector<4x16xf32>
    %23 = vector.extract_strided_slice %21 {offsets = [4, 0], sizes = [4, 16], strides = [1, 1]} : vector<8x16xf32> to vector<4x16xf32>
    %24 = arith.addf %22, %23 : vector<4x16xf32>
    %cst_10 = arith.constant 9.99999974E-6 : f32
    %25 = vector.broadcast %cst_10 : f32 to vector<4x16xf32>
    %26 = arith.addf %24, %25 : vector<4x16xf32>
    %27 = arith.negf %26 : vector<4x16xf32>
    %28 = math.exp %27 : vector<4x16xf32>
    %cst_11 = arith.constant 1.000000e+00 : f32
    %29 = vector.broadcast %cst_11 : f32 to vector<4x16xf32>
    %30 = arith.addf %29, %28 : vector<4x16xf32>
    %31 = arith.divf %29, %30 : vector<4x16xf32>
    %32 = tpu.concatenate %31, %31 in 0 : vector<4x16xf32>, vector<4x16xf32> -> vector<8x16xf32>
    %33 = arith.mulf %20, %32 : vector<8x16xf32>
    %c0_12 = arith.constant 0 : index
    %c0_13 = arith.constant 0 : index
    %34 = vector.load %arg4[%c0_12, %c0_13] : memref<1x16xf32, #tpu.memory_space<vmem>>, vector<1x16xf32>
    %35 = vector.broadcast %34 : vector<1x16xf32> to vector<8x16xf32>
    %36 = arith.mulf %33, %35 : vector<8x16xf32>
    %cst_14 = arith.constant dense<0.000000e+00> : vector<8xf32>
    %37 = vector.multi_reduction <add>, %36, %cst_14 [1] : vector<8x16xf32> to vector<8xf32>
    %38 = vector.shape_cast %37 : vector<8xf32> to vector<8x1xf32>
    %39 = arith.mulf %38, %38 : vector<8x1xf32>
    %40 = vector.extract_strided_slice %39 {offsets = [0, 0], sizes = [4, 1], strides = [1, 1]} : vector<8x1xf32> to vector<4x1xf32>
    %41 = vector.extract_strided_slice %39 {offsets = [4, 0], sizes = [4, 1], strides = [1, 1]} : vector<8x1xf32> to vector<4x1xf32>
    %42 = arith.addf %40, %41 : vector<4x1xf32>
    %cst_15 = arith.constant 1.000000e-24 : f32
    %43 = vector.broadcast %cst_15 : f32 to vector<4x1xf32>
    %44 = arith.maximumf %42, %43 : vector<4x1xf32>
    %45 = math.rsqrt %44 : vector<4x1xf32>
    %46 = tpu.concatenate %45, %45 in 0 : vector<4x1xf32>, vector<4x1xf32> -> vector<8x1xf32>
    %47 = arith.mulf %38, %46 : vector<8x1xf32>
    %48 = tpu.iota {dimensions = array<i32: 0>} : vector<8x8xi32>
    %49 = tpu.iota {dimensions = array<i32: 1>} : vector<8x8xi32>
    %50 = arith.cmpi eq, %48, %49 : vector<8x8xi32>
    %51 = arith.extui %50 : vector<8x8xi1> to vector<8x8xi32>
    %52 = arith.sitofp %51 : vector<8x8xi32> to vector<8x8xf32>
    %53 = vector.broadcast %47 : vector<8x1xf32> to vector<8x8xf32>
    %54 = arith.mulf %53, %52 : vector<8x8xf32>
    %cst_16 = arith.constant dense<0.000000e+00> : vector<8xf32>
    %55 = vector.multi_reduction <add>, %54, %cst_16 [0] : vector<8x8xf32> to vector<8xf32>
    %56 = vector.shape_cast %55 : vector<8xf32> to vector<1x8xf32>
    %c0_17 = arith.constant 0 : index
    %c0_18 = arith.constant 0 : index
    %57 = vector.load %arg5[%c0_17, %c0_18] : memref<1x8xf32, #tpu.memory_space<vmem>>, vector<1x8xf32>
    tpu.vector_store %arg5[%c0_17, %c0_18], %56 {strides = array<i32>} : memref<1x8xf32, #tpu.memory_space<vmem>>, vector<1x8xf32>,
    return
  }
}

</mosaic_0001>

<llo_original>
// kernel: second_forward.1
$region0: #{second_forward.1}
  #allocation0 [shape = 'u32[]', space=smem, size = 0x4, offset = 0x4, fixed_abs, tag = 'smem constant byte address 0x4 - core index']
  #allocation1 [shape = 'u32[144,128]{1,0:T(1,128)}', space=vmem, size = 0x12000, scoped, tag = 'internal scratch']
  %s0 = inlined_call_operand.vmem [shape: f32[8,10], index: 0, kind: input, shape index: {}]
  %s1 = inlined_call_operand.vmem [shape: f32[8,1], index: 1, kind: input, shape index: {}]
  %s2 = inlined_call_operand.vmem [shape: f32[10,16], index: 2, kind: input, shape index: {}]
  %s3 = inlined_call_operand.hbm [shape: f32[16,16], index: 3, kind: input, shape index: {}]
  %s4 = inlined_call_operand.vmem [shape: f32[1,16], index: 4, kind: input, shape index: {}]
  %s5 = inlined_call_operand.vmem [shape: f32[1,8], index: 5, kind: output, shape index: {}]
  %s6 = sld [smem:[#allocation0]]
  $region34: #{second_forward.1} parent=0
    _
  %s8 = ssub.s32 1, %s6
  %s9 = scalar_select 0, %s8, %s6
  $region1: #{second_forward.1} parent=0
    #allocation2 [shape = 'u8[8192]{0}', space=vmem, size = 0x2000, scoped, tag = 'input window, operand 3, single buffered']
    #allocation3 [shape = 's32[1]{0}', space=sflag, size = 0x4, scoped, tag = 'scoped memory for second_forward.1']
    %10 = vsyncpa [#allocation3], 0
    // Predicated region
    $region2: #{second_forward.1} parent=1 // pred_check
      _
    $region3: #{second_forward.1} parent=1 // pred_check_branch
      %12 = sbr.rel (0) target = $region5
    $region4: #{second_forward.1} parent=1 // pred_region
      _
    $region5: #{second_forward.1} parent=1 // pred_fallthru
      _
    // Predicated region
    $region6: #{second_forward.1} parent=1 // pred_check
      _
    $region7: #{second_forward.1} parent=1 // pred_check_branch
      %14 = sbr.rel (0) target = $region9
    $region8: #{second_forward.1} parent=1 // pred_region
      _
    $region9: #{second_forward.1} parent=1 // pred_fallthru
      _
    // Predicated region
    $region10: #{second_forward.1} parent=1 // pred_check
      _
    $region11: #{second_forward.1} parent=1 // pred_check_branch
      %16 = sbr.rel (0) target = $region13
    $region12: #{second_forward.1} parent=1 // pred_region
      _
    $region13: #{second_forward.1} parent=1 // pred_fallthru
      _
    // Predicated region
    $region14: #{second_forward.1} parent=1 // pred_check
      _
    $region15: #{second_forward.1} parent=1 // pred_check_branch
      %18 = sbr.rel (0) target = $region17
    $region16: #{second_forward.1} parent=1 // pred_region
      %s20 = ssub.s32 256, 256
      %21 = vsyncadd [#allocation3], %s20
      %s22 = sshll.u32 [#allocation2], 4
      %s23 = int_to_ptr.vmem [resolvable:$true] %s22
      %28 = dma.hbm_to_vmem [thread:$0]  %s3, 256, %s23, [#allocation3], 128, 128, 8
    $region17: #{second_forward.1} parent=1 // pred_fallthru
      _
    // Predicated region
    $region18: #{second_forward.1} parent=1 // pred_check
      _
    $region19: #{second_forward.1} parent=1 // pred_check_branch
      %30 = sbr.rel (0) target = $region21
    $region20: #{second_forward.1} parent=1 // pred_region
      _
    $region21: #{second_forward.1} parent=1 // pred_fallthru
      _
    // Predicated region
    $region22: #{second_forward.1} parent=1 // pred_check
      _
    $region23: #{second_forward.1} parent=1 // pred_check_branch
      %32 = sbr.rel (0) target = $region25
    $region24: #{second_forward.1} parent=1 // pred_region
      %33 = dma.done [#allocation3], 256
    $region25: #{second_forward.1} parent=1 // pred_fallthru
      _
    %v34 = vld [vmem:[%s0] sm:$0xff]
    %v35 = vld [vmem:[%s1] sm:$0xff]
    %37 = vset.pattern.permute.xlu0 0
    %38 = vperm.xlu0 %37, %v35
    %v39 = vpop.permute.xlu0 %38
    %v41 = vsub.f32 %v34, %v39
    %v42 = vld [vmem:[%s2] sm:$0xff]
    %v43 = vld [vmem:[%s2 + $0x8] sm:$0x3]
    %vm44 = vcmask 80896
    %v46 = vsel %vm44, %v41, 0
    %vm48 = vcmask 1041408
    %v50 = vsel %vm48, %v43, 0
    %52 = vmatprep.subr.mxu0 0.0
    %53 = vmatpush1.msra.mxu0 0.0
    %54 = vmatprep.subr.mxu0 0.0
    %55 = vmatpush1.msra.mxu0 0.0
    %56 = vmatprep.subr.mxu0 0.0
    %57 = vmatpush1.msra.mxu0 0.0
    %58 = vmatprep.subr.mxu0 0.0
    %59 = vmatpush1.msra.mxu0 0.0
    %60 = vmatprep.subr.mxu0 0.0
    %61 = vmatpush1.msra.mxu0 0.0
    %62 = vmatprep.subr.mxu0 0.0
    %63 = vmatpush1.msra.mxu0 0.0
    %64 = vmatprep.subr.mxu0 0.0
    %65 = vmatpush1.msra.mxu0 0.0
    %66 = vmatprep.subr.mxu0 0.0
    %67 = vmatpush1.msra.mxu0 0.0
    %68 = vmatprep.subr.mxu0 0.0
    %69 = vmatpush1.msra.mxu0 0.0
    %70 = vmatprep.subr.mxu0 0.0
    %71 = vmatpush1.msra.mxu0 0.0
    %72 = vmatprep.subr.mxu0 0.0
    %73 = vmatpush1.msra.mxu0 0.0
    %74 = vmatprep.subr.mxu0 0.0
    %75 = vmatpush1.msra.mxu0 0.0
    %76 = vmatprep.subr.mxu0 0.0
    %77 = vmatpush1.msra.mxu0 0.0
    %78 = vmatprep.subr.mxu0 0.0
    %79 = vmatpush1.msra.mxu0 0.0
    %80 = vmatprep.subr.mxu0 0.0
    %81 = vmatpush1.msra.mxu0 %v50
    %82 = vmatprep.subr.mxu0 0.0
    %83 = vmatpush1.msra.mxu0 %v42
    %84 = vmatprep.subr.mxu0 0.0
    %85 = vmatpush2.msra.mxu0 0.0
    %86 = vmatprep.subr.mxu0 0.0
    %87 = vmatpush2.msra.mxu0 0.0
    %88 = vmatprep.subr.mxu0 0.0
    %89 = vmatpush2.msra.mxu0 0.0
    %90 = vmatprep.subr.mxu0 0.0
    %91 = vmatpush2.msra.mxu0 0.0
    %92 = vmatprep.subr.mxu0 0.0
    %93 = vmatpush2.msra.mxu0 0.0
    %94 = vmatprep.subr.mxu0 0.0
    %95 = vmatpush2.msra.mxu0 0.0
    %96 = vmatprep.subr.mxu0 0.0
    %97 = vmatpush2.msra.mxu0 0.0
    %98 = vmatprep.subr.mxu0 0.0
    %99 = vmatpush2.msra.mxu0 0.0
    %100 = vmatprep.subr.mxu0 0.0
    %101 = vmatpush2.msra.mxu0 0.0
    %102 = vmatprep.subr.mxu0 0.0
    %103 = vmatpush2.msra.mxu0 0.0
    %104 = vmatprep.subr.mxu0 0.0
    %105 = vmatpush2.msra.mxu0 0.0
    %106 = vmatprep.subr.mxu0 0.0
    %107 = vmatpush2.msra.mxu0 0.0
    %108 = vmatprep.subr.mxu0 0.0
    %109 = vmatpush2.msra.mxu0 0.0
    %110 = vmatprep.subr.mxu0 0.0
    %111 = vmatpush2.msra.mxu0 0.0
    %112 = vmatprep.subr.mxu0 0.0
    %113 = vmatpush2.msra.mxu0 0.0
    %114 = vmatprep.subr.mxu0 0.0
    %115 = vmatpush2.msra.mxu0 0.0
    %116 = vmatprep.mubr.f32.mxu0 0.0
    %117 = vmatmul.mubr.f32.gmra.mxu0 %v46
    %v118 = vpop.f32.mrf.mxu0
    %v119 = vadd.f32 0.0, %v118
    %v120 = vpop.f32.mrf.mxu0
    %121 = vdwg.mxu0
    %v122 = vmul.f32 %v119, %v119
    %v124 = vrot.slane %v122, 4
    %v126 = vadd.f32 %v122, %v124
    %v127 = vadd.f32 %v126, 1e-05
    %v128 = vxor.u32 %v127, 2147483648
    %v129 = vmul.f32 %v128, 1.442695
    %v130 = vpow.pop %v129
    %v131 = vadd.f32 %v130, 1.0
    %v132 = vrcp.pop %v131
    %v133 = vmul.f32 1.0, %v132
    %v135 = vrot.slane %v133, 4
    %vm137 = vcmask 1043456
    %v138 = vsel %vm137, %v133, %v135
    %v139 = vmul.f32 %v119, %v138
    %v140 = vld [vmem:[#allocation2] sm:$0xff]
    %v141 = vld [vmem:[#allocation2 + $0x8] sm:$0xff]
    %vm142 = vcmask 130048
    %v144 = vsel %vm142, %v139, 0
    %146 = vmatprep.subr.mxu0 0.0
    %147 = vmatpush1.msra.mxu0 0.0
    %148 = vmatprep.subr.mxu0 0.0
    %149 = vmatpush1.msra.mxu0 0.0
    %150 = vmatprep.subr.mxu0 0.0
    %151 = vmatpush1.msra.mxu0 0.0
    %152 = vmatprep.subr.mxu0 0.0
    %153 = vmatpush1.msra.mxu0 0.0
    %154 = vmatprep.subr.mxu0 0.0
    %155 = vmatpush1.msra.mxu0 0.0
    %156 = vmatprep.subr.mxu0 0.0
    %157 = vmatpush1.msra.mxu0 0.0
    %158 = vmatprep.subr.mxu0 0.0
    %159 = vmatpush1.msra.mxu0 0.0
    %160 = vmatprep.subr.mxu0 0.0
    %161 = vmatpush1.msra.mxu0 0.0
    %162 = vmatprep.subr.mxu0 0.0
    %163 = vmatpush1.msra.mxu0 0.0
    %164 = vmatprep.subr.mxu0 0.0
    %165 = vmatpush1.msra.mxu0 0.0
    %166 = vmatprep.subr.mxu0 0.0
    %167 = vmatpush1.msra.mxu0 0.0
    %168 = vmatprep.subr.mxu0 0.0
    %169 = vmatpush1.msra.mxu0 0.0
    %170 = vmatprep.subr.mxu0 0.0
    %171 = vmatpush1.msra.mxu0 0.0
    %172 = vmatprep.subr.mxu0 0.0
    %173 = vmatpush1.msra.mxu0 0.0
    %174 = vmatprep.subr.mxu0 0.0
    %175 = vmatpush1.msra.mxu0 %v141
    %176 = vmatprep.subr.mxu0 0.0
    %177 = vmatpush1.msra.mxu0 %v140
    %178 = vmatprep.subr.mxu0 0.0
    %179 = vmatpush2.msra.mxu0 0.0
    %180 = vmatprep.subr.mxu0 0.0
    %181 = vmatpush2.msra.mxu0 0.0
    %182 = vmatprep.subr.mxu0 0.0
    %183 = vmatpush2.msra.mxu0 0.0
    %184 = vmatprep.subr.mxu0 0.0
    %185 = vmatpush2.msra.mxu0 0.0
    %186 = vmatprep.subr.mxu0 0.0
    %187 = vmatpush2.msra.mxu0 0.0
    %188 = vmatprep.subr.mxu0 0.0
    %189 = vmatpush2.msra.mxu0 0.0
    %190 = vmatprep.subr.mxu0 0.0
    %191 = vmatpush2.msra.mxu0 0.0
    %192 = vmatprep.subr.mxu0 0.0
    %193 = vmatpush2.msra.mxu0 0.0
    %194 = vmatprep.subr.mxu0 0.0
    %195 = vmatpush2.msra.mxu0 0.0
    %196 = vmatprep.subr.mxu0 0.0
    %197 = vmatpush2.msra.mxu0 0.0
    %198 = vmatprep.subr.mxu0 0.0
    %199 = vmatpush2.msra.mxu0 0.0
    %200 = vmatprep.subr.mxu0 0.0
    %201 = vmatpush2.msra.mxu0 0.0
    %202 = vmatprep.subr.mxu0 0.0
    %203 = vmatpush2.msra.mxu0 0.0
    %204 = vmatprep.subr.mxu0 0.0
    %205 = vmatpush2.msra.mxu0 0.0
    %206 = vmatprep.subr.mxu0 0.0
    %207 = vmatpush2.msra.mxu0 0.0
    %208 = vmatprep.subr.mxu0 0.0
    %209 = vmatpush2.msra.mxu0 0.0
    %210 = vmatprep.mubr.f32.mxu0 0.0
    %211 = vmatmul.mubr.f32.gmra.mxu0 %v144
    %v212 = vpop.f32.mrf.mxu0
    %v213 = vadd.f32 0.0, %v212
    %v214 = vpop.f32.mrf.mxu0
    %215 = vdwg.mxu0
    %v216 = vmul.f32 %v213, %v213
    %v218 = vrot.slane %v216, 4
    %v220 = vadd.f32 %v216, %v218
    %v221 = vadd.f32 %v220, 1e-05
    %v222 = vxor.u32 %v221, 2147483648
    %v223 = vmul.f32 %v222, 1.442695
    %v224 = vpow.pop %v223
    %v225 = vadd.f32 %v224, 1.0
    %v226 = vrcp.pop %v225
    %v227 = vmul.f32 1.0, %v226
    %v229 = vrot.slane %v227, 4
    %v231 = vsel %vm137, %v227, %v229
    %v232 = vmul.f32 %v213, %v231
    %v233 = vld [vmem:[%s4] sm:$0x1]
    %v235 = vlaneseq
    %v236 = vshrl.u32 %v235, 7
    %v237 = vsub.s32 0, %v236
    %v238 = vrot.slane %v233, %v237
    %v240 = vmul.f32 %v232, %v238
    %v241 = vsel %vm142, %v240, 0.0
    %242 = vadd.xlane.f32.xlu0 %v241
    %v243 = vpop.xlane.xlu0 %242
    %v244 = vmul.f32 %v243, %v243
    %v246 = vrot.slane %v244, 4
    %v248 = vadd.f32 %v244, %v246
    %v249 = vmax.f32 %v248, 1e-24
    %v250 = vrsqrt.pop %v249
    %v252 = vrot.slane %v250, 4
    %v254 = vsel %vm137, %v250, %v252
    %v255 = vmul.f32 %v243, %v254
    %v256 = vlaneseq
    %v257 = vshrl.u32 %v256, 7
    %v258 = vlaneseq
    %v259 = vand.u32 %v258, 127
    %vm260 = vcmp.eq.s32.totalorder %v257, %v259
    %v261 = vsel %vm260, 1, 0
    %v262 = vcvt.s32.f32 %v261
    %264 = vset.pattern.permute.xlu0 0
    %265 = vperm.xlu0 %264, %v255
    %v266 = vpop.permute.xlu0 %265
    %v268 = vmul.f32 %v266, %v262
    %vm269 = vcmask 64512
    %v270 = vsel %vm269, %v268, 0.0
    %v271 = vrot.slane %v270, 4
    %v272 = vadd.f32 %v270, %v271
    %v273 = vrot.slane %v272, 2
    %v274 = vadd.f32 %v272, %v273
    %v275 = vrot.slane %v274, 1
    %v276 = vadd.f32 %v274, %v275
    %vm277 = vcmask 57344
    %278 = vst.msk [vmem:[%s5] sm:$0x1] %vm277, %v276
    // Predicated region
    $region26: #{second_forward.1} parent=1 // pred_check
      _
    $region27: #{second_forward.1} parent=1 // pred_check_branch
      %280 = sbr.rel (0) target = $region29
    $region28: #{second_forward.1} parent=1 // pred_region
      _
    $region29: #{second_forward.1} parent=1 // pred_fallthru
      _
    // Predicated region
    $region30: #{second_forward.1} parent=1 // pred_check
      _
    $region31: #{second_forward.1} parent=1 // pred_check_branch
      %282 = sbr.rel (0) target = $region33
    $region32: #{second_forward.1} parent=1 // pred_region
      _
    $region33: #{second_forward.1} parent=1 // pred_fallthru
      _
    %283 = vsyncpa [#allocation3], 1

</llo_original>
